<compile_context>
chip_gen: v6e
topology: v6e:2x2x1
jax: 0.10.0
libtpu: 0.0.40
codegen_flags: <defaults>
</compile_context>

<pallas_src>
import functools

import jax
import jax.numpy as jnp
from jax.experimental import pallas as pl
from jax.experimental.pallas import tpu as pltpu

EPS = 1e-5


# ----------------------------------------------------------------------------
# small helpers used inside kernels
# ----------------------------------------------------------------------------
def _gate(i, on):
    """Block index `i` if `on` else 0 (phase-gates input streaming)."""
    return jnp.where(on, i, 0)


def _accum_stats(x, s_sum, s_sq, is_first):
    """Accumulate per-channel sum / sum-of-squares of x (rows = batch)."""
    @pl.when(is_first)
    def _():
        s_sum[...] = jnp.zeros(s_sum.shape, s_sum.dtype)
        s_sq[...] = jnp.zeros(s_sq.shape, s_sq.dtype)

    s_sum[...] += jnp.sum(x, axis=0, keepdims=True)
    s_sq[...] += jnp.sum(x * x, axis=0, keepdims=True)


def _finalize_stats(s_sum, s_sq, count):
    """Convert (sum, sumsq) scratch in place to (mean, rstd) (biased var)."""
    mean = s_sum[...] / float(count)
    var = s_sq[...] / float(count) - mean * mean
    s_sum[...] = mean
    s_sq[...] = jax.lax.rsqrt(var + EPS)


def _bn_apply(x, mean, rstd, gamma, beta):
    return (x - mean) * rstd * gamma + beta


def _small_matmul(x, w, b):
    """(M, K) @ (K, Nout) + b for tiny K as VPU broadcast-FMA (keeps these
    K=3/4 contractions off the 128/256-wide MXU)."""
    acc = x[:, 0:1] * w[0:1, :]
    for a in range(1, w.shape[0]):
        acc = acc + x[:, a:a + 1] * w[a:a + 1, :]
    return acc + b


# ----------------------------------------------------------------------------
# Kernel A: linear1 (no bias) -> bn1 -> relu -> fused [q | k | v] projection
# grid = (2 phases, N tiles); phase 0 = bn1 batch stats, phase 1 = apply + qkv
# ----------------------------------------------------------------------------
def qkv_kernel(n_total,
               x_ref, w1_ref, g1_ref, b1_ref, wqkv_ref, bqkv_ref,
               qkv_ref, s_mean, s_rstd):
    ph = pl.program_id(0)
    i = pl.program_id(1)
    nt = pl.num_programs(1)

    h = jnp.dot(x_ref[...], w1_ref[...], preferred_element_type=jnp.float32)

    @pl.when(ph == 0)                      # pass 1: bn1 statistics
    def _():
        _accum_stats(h, s_mean, s_rstd, i == 0)

        @pl.when(i == nt - 1)
        def _():
            _finalize_stats(s_mean, s_rstd, n_total)

    @pl.when(ph == 1)                      # pass 2: bn1 -> relu -> q|k|v
    def _():
        hn = jnp.maximum(_bn_apply(h, s_mean[...], s_rstd[...],
                                   g1_ref[...], b1_ref[...]), 0.0)
        qkv_ref[...] = (jnp.dot(hn, wqkv_ref[...],
                                preferred_element_type=jnp.float32)
                        + bqkv_ref[...])


# ----------------------------------------------------------------------------
# Kernel B: PointTransformerLayer core (after neighbor gather) + bn2 stats
# grid = (4 phases, N tiles):
#   phase 0: stats of linear_p's LayerNorm1d(3) input
#   phase 1: stats of linear_w's LayerNorm1d(C) input (r_qk)
#   phase 2: stats of linear_w's LayerNorm1d(Cs) input
#   phase 3: attention weights, softmax (compact Cs), aggregation, bn2 stats
# ----------------------------------------------------------------------------
def attn_kernel(n_total, share_planes,
                q_ref, xk_ref, xv_ref, prel_ref,
                wp1_ref, bp1_ref, gp_ref, bp_ref, wp2_ref, bp2_ref,
                gw1_ref, bw1_ref, ww1_ref, bww1_ref,
                gw2_ref, bw2_ref, ww2_ref, bww2_ref,
                y_ref, bn2_mean_ref, bn2_rstd_ref,
                sp_m, sp_r, sr_m, sr_r, s2_m, s2_r, sy_m, sy_r):
    TN, ns, C = xk_ref.shape
    Cs = ww1_ref.shape[1]
    M = TN * ns
    rows_all = n_total * ns

    ph = pl.program_id(0)
    i = pl.program_id(1)
    nt = pl.num_programs(1)
    first = i == 0
    last = i == nt - 1

    def pr1_tile():                                    # (M, 3)  Linear(3, 3)
        return _small_matmul(prel_ref[...].reshape(M, 3),
                             wp1_ref[...], bp1_ref[...])

    def p_r_tile():                                    # (M, C)  linear_p out
        prn = jnp.maximum(_bn_apply(pr1_tile(), sp_m[...], sp_r[...],
                                    gp_ref[...], bp_ref[...]), 0.0)
        return _small_matmul(prn, wp2_ref[...], bp2_ref[...])

    def rqk_tile(p_r):                                 # (M, C)  x_k - x_q + p_r
        r3 = xk_ref[...] - q_ref[...][:, None, :] + p_r.reshape(TN, ns, C)
        return r3.reshape(M, C)

    def r2_tile(rqk):                                  # (M, Cs) mid linear_w
        rn = jnp.maximum(_bn_apply(rqk, sr_m[...], sr_r[...],
                                   gw1_ref[...], bw1_ref[...]), 0.0)
        return (jnp.dot(rn, ww1_ref[...], preferred_element_type=jnp.float32)
                + bww1_ref[...])

    @pl.when(ph == 0)
    def _():
        _accum_stats(pr1_tile(), sp_m, sp_r, first)

        @pl.when(last)
        def _():
            _finalize_stats(sp_m, sp_r, rows_all)

    @pl.when(ph == 1)
    def _():
        _accum_stats(rqk_tile(p_r_tile()), sr_m, sr_r, first)

        @pl.when(last)
        def _():
            _finalize_stats(sr_m, sr_r, rows_all)

    @pl.when(ph == 2)
    def _():
        _accum_stats(r2_tile(rqk_tile(p_r_tile())), s2_m, s2_r, first)

        @pl.when(last)
        def _():
            _finalize_stats(s2_m, s2_r, rows_all)

    @pl.when(ph == 3)
    def _():
        p_r = p_r_tile()
        r2 = r2_tile(rqk_tile(p_r))
        r2n = jnp.maximum(_bn_apply(r2, s2_m[...], s2_r[...],
                                    gw2_ref[...], bw2_ref[...]), 0.0)
        w = _small_matmul(r2n, ww2_ref[...], bww2_ref[...])        # (M, Cs)

        # softmax over the neighbor axis at the compact width Cs (8x fewer
        # exp / cross-lane reductions than at full C)
        w = w.reshape(TN, ns, Cs)
        w = w - jnp.max(w, axis=1, keepdims=True)
        w = jnp.exp(w)
        w = w / jnp.sum(w, axis=1, keepdims=True)

        # expand per-share weights to full channel width AFTER the softmax:
        # channel c = s*Cs + i uses w[..., i] == tiled[..., c % Cs]
        w_full = jnp.tile(w.reshape(M, Cs),
                          (1, share_planes)).reshape(TN, ns, C)
        y = jnp.sum((xv_ref[...] + p_r.reshape(TN, ns, C)) * w_full, axis=1)
        y_ref[...] = y

        _accum_stats(y, sy_m, sy_r, first)

        @pl.when(last)
        def _():
            _finalize_stats(sy_m, sy_r, n_total)
            bn2_mean_ref[...] = sy_m[...]
            bn2_rstd_ref[...] = sy_r[...]


# ----------------------------------------------------------------------------
# Kernel C: bn2 apply -> relu -> linear3 (no bias) -> bn3 -> residual -> relu
# grid = (2 phases, N tiles); phase 0 = bn3 stats, phase 1 = apply + residual
# ----------------------------------------------------------------------------
def out_kernel(n_total,
               y_ref, x_ref, m2_ref, r2_ref, g2_ref, b2_ref,
               w3_ref, g3_ref, b3_ref,
               o_ref, s_mean, s_rstd):
    ph = pl.program_id(0)
    i = pl.program_id(1)
    nt = pl.num_programs(1)

    y2 = jnp.maximum(_bn_apply(y_ref[...], m2_ref[...], r2_ref[...],
                               g2_ref[...], b2_ref[...]), 0.0)
    h3 = jnp.dot(y2, w3_ref[...], preferred_element_type=jnp.float32)

    @pl.when(ph == 0)                      # bn3 statistics
    def _():
        _accum_stats(h3, s_mean, s_rstd, i == 0)

        @pl.when(i == nt - 1)
        def _():
            _finalize_stats(s_mean, s_rstd, n_total)

    @pl.when(ph == 1)                      # bn3 -> residual -> relu
    def _():
        o_ref[...] = jnp.maximum(
            _bn_apply(h3, s_mean[...], s_rstd[...], g3_ref[...], b3_ref[...])
            + x_ref[...], 0.0)


# ----------------------------------------------------------------------------
# Wrapper
# ----------------------------------------------------------------------------
def _pick_tile(n, target):
    """Largest multiple of 8 that divides n and is <= target (fallback: n)."""
    t = min(target, n)
    t = max(8, (t // 8) * 8)
    while t > 8 and n % t:
        t -= 8
    return t if n % t == 0 else n


def _full_spec(shape):
    return pl.BlockSpec(shape, lambda ph, i: tuple(0 for _ in shape))


def bottleneck_forward(p, x, o, params, share_planes=8, nsample=16,
                       block_n=256):
    N, Cin = x.shape
    C = params["w1"].shape[1]
    Cs = C // share_planes
    TN = _pick_tile(N, block_n)
    nt = N // TN
    f32 = jnp.float32

    # phase axis + stats accumulation are order-dependent -> 'arbitrary'
    cparams = pltpu.CompilerParams(
        dimension_semantics=("arbitrary", "arbitrary"))

    # fused q|k|v projection: one lane-dense (C, 3C) matmul instead of three
    wqkv = jnp.concatenate([params["wq"], params["wk"], params["wv"]], axis=1)
    bqkv = jnp.concatenate([params["bq"], params["bk"], params["bv"]], axis=1)

    # ---- stage 1: linear1 -> bn1 -> relu -> fused q/k/v -------------------
    qkv = pl.pallas_call(
        functools.partial(qkv_kernel, N),
        out_shape=jax.ShapeDtypeStruct((N, 3 * C), f32),
        grid_spec=pltpu.PrefetchScalarGridSpec(
            num_scalar_prefetch=0,
            grid=(2, nt),
            in_specs=[
                pl.BlockSpec((TN, Cin), lambda ph, i: (i, 0)),
                _full_spec((Cin, C)),
                _full_spec((1, C)),
                _full_spec((1, C)),
                _full_spec((C, 3 * C)),
                _full_spec((1, 3 * C)),
            ],
            out_specs=pl.BlockSpec((TN, 3 * C),
                                   lambda ph, i: (_gate(i, ph >= 1), 0)),
            scratch_shapes=[pltpu.VMEM((1, C), f32),
                            pltpu.VMEM((1, C), f32)],
        ),
        compiler_params=cparams,
    )(x, params["w1"], params["g1"], params["b1"], wqkv, bqkv)
    q, k, v = qkv[:, :C], qkv[:, C:2 * C], qkv[:, 2 * C:]

    # ---- kNN + neighbor gather (JAX glue) ----------------------------------
    # TODO(synk): pointops.knn_query_and_group (per-segment kNN top-k + gather)
    # has no clean Pallas equivalent here; the O(N^2) distance matrix and the
    # nsample-expanded HBM gather of k/v should eventually move in-kernel
    # (scalar-prefetched idx + DMA gather) for large point counts / short
    # segments.
    seg = jnp.searchsorted(o, jnp.arange(N, dtype=o.dtype), side="right")
    d2 = jnp.sum((p[:, None, :] - p[None, :, :]) ** 2, axis=-1)
    d2 = jnp.where(seg[:, None] != seg[None, :], jnp.inf, d2)
    _, idx = jax.lax.top_k(-d2, nsample)            # (N, nsample), incl. self
    prel = p[idx] - p[:, None, :]                   # (N, nsample, 3)
    xk_g = k[idx]                                   # (N, nsample, C)
    xv_g = v[idx]                                   # (N, nsample, C)

    # ---- stage 2: point-transformer core + bn2 statistics ------------------
    y, bn2_mean, bn2_rstd = pl.pallas_call(
        functools.partial(attn_kernel, N, share_planes),
        out_shape=(jax.ShapeDtypeStruct((N, C), f32),
                   jax.ShapeDtypeStruct((1, C), f32),
                   jax.ShapeDtypeStruct((1, C), f32)),
        grid_spec=pltpu.PrefetchScalarGridSpec(
            num_scalar_prefetch=0,
            grid=(4, nt),
            in_specs=[
                # q / xk only needed from phase 1 on, xv only in phase 3:
                # gate their block index so they are not re-streamed earlier.
                pl.BlockSpec((TN, C), lambda ph, i: (_gate(i, ph >= 1), 0)),
                pl.BlockSpec((TN, nsample, C),
                             lambda ph, i: (_gate(i, ph >= 1), 0, 0)),
                pl.BlockSpec((TN, nsample, C),
                             lambda ph, i: (_gate(i, ph >= 3), 0, 0)),
                pl.BlockSpec((TN, nsample, 3), lambda ph, i: (i, 0, 0)),
                _full_spec((3, 3)), _full_spec((1, 3)),
                _full_spec((1, 3)), _full_spec((1, 3)),
                _full_spec((3, C)), _full_spec((1, C)),
                _full_spec((1, C)), _full_spec((1, C)),
                _full_spec((C, Cs)), _full_spec((1, Cs)),
                _full_spec((1, Cs)), _full_spec((1, Cs)),
                _full_spec((Cs, Cs)), _full_spec((1, Cs)),
            ],
            out_specs=(
                pl.BlockSpec((TN, C), lambda ph, i: (_gate(i, ph >= 3), 0)),
                _full_spec((1, C)),
                _full_spec((1, C)),
            ),
            scratch_shapes=[
                pltpu.VMEM((1, 3), f32), pltpu.VMEM((1, 3), f32),
                pltpu.VMEM((1, C), f32), pltpu.VMEM((1, C), f32),
                pltpu.VMEM((1, Cs), f32), pltpu.VMEM((1, Cs), f32),
                pltpu.VMEM((1, C), f32), pltpu.VMEM((1, C), f32),
            ],
        ),
        compiler_params=cparams,
    )(q, xk_g, xv_g, prel,
      params["wp1"], params["bp1"], params["gp"], params["bp"],
      params["wp2"], params["bp2"],
      params["gw1"], params["bw1"], params["ww1"], params["bww1"],
      params["gw2"], params["bw2"], params["ww2"], params["bww2"])

    # ---- stage 3: bn2 apply -> linear3 -> bn3 -> residual -> relu ----------
    out = pl.pallas_call(
        functools.partial(out_kernel, N),
        out_shape=jax.ShapeDtypeStruct((N, C), f32),
        grid_spec=pltpu.PrefetchScalarGridSpec(
            num_scalar_prefetch=0,
            grid=(2, nt),
            in_specs=[
                pl.BlockSpec((TN, C), lambda ph, i: (i, 0)),
                pl.BlockSpec((TN, Cin), lambda ph, i: (i, 0)),
                _full_spec((1, C)), _full_spec((1, C)),
                _full_spec((1, C)), _full_spec((1, C)),
                _full_spec((C, C)),
                _full_spec((1, C)), _full_spec((1, C)),
            ],
            out_specs=pl.BlockSpec((TN, C),
                                   lambda ph, i: (_gate(i, ph >= 1), 0)),
            scratch_shapes=[pltpu.VMEM((1, C), f32),
                            pltpu.VMEM((1, C), f32)],
        ),
        compiler_params=cparams,
    )(y, x, bn2_mean, bn2_rstd, params["g2"], params["b2"],
      params["w3"], params["g3"], params["b3"])

    return [p, out, o]


# ----------------------------------------------------------------------------
# Pure-JAX reference (mirrors the PyTorch module, training-mode BN statistics)
# ----------------------------------------------------------------------------
def _bn_ref(x, gamma, beta):
    m = jnp.mean(x, axis=0, keepdims=True)
    v = jnp.mean(x * x, axis=0, keepdims=True) - m * m
    return (x - m) * jax.lax.rsqrt(v + EPS) * gamma + beta


def bottleneck_reference(p, x, o, params, share_planes=8, nsample=16):
    N, _ = x.shape
    C = params["w1"].shape[1]
    Cs = C // share_planes

    h = jnp.maximum(_bn_ref(x @ params["w1"], params["g1"], params["b1"]), 0.0)
    q = h @ params["wq"] + params["bq"]
    k = h @ params["wk"] + params["bk"]
    v = h @ params["wv"] + params["bv"]

    seg = jnp.searchsorted(o, jnp.arange(N, dtype=o.dtype), side="right")
    d2 = jnp.sum((p[:, None, :] - p[None, :, :]) ** 2, axis=-1)
    d2 = jnp.where(seg[:, None] != seg[None, :], jnp.inf, d2)
    _, idx = jax.lax.top_k(-d2, nsample)
    prel = p[idx] - p[:, None, :]
    xk, xv = k[idx], v[idx]

    pr = prel.reshape(N * nsample, 3) @ params["wp1"] + params["bp1"]
    pr = jnp.maximum(_bn_ref(pr, params["gp"], params["bp"]), 0.0)
    p_r = pr @ params["wp2"] + params["bp2"]                      # (N*ns, C)

    r = (xk - q[:, None, :]
         + p_r.reshape(N, nsample, C)).reshape(N * nsample, C)
    r = jnp.maximum(_bn_ref(r, params["gw1"], params["bw1"]), 0.0)
    r = r @ params["ww1"] + params["bww1"]
    r = jnp.maximum(_bn_ref(r, params["gw2"], params["bw2"]), 0.0)
    w = (r @ params["ww2"] + params["bww2"]).reshape(N, nsample, Cs)
    w = jax.nn.softmax(w, axis=1)

    xvp = (xv + p_r.reshape(N, nsample, C)).reshape(
        N, nsample, share_planes, Cs)
    y = jnp.einsum("ntsi,nti->nsi", xvp, w).reshape(N, C)

    y = jnp.maximum(_bn_ref(y, params["g2"], params["b2"]), 0.0)
    out = _bn_ref(y @ params["w3"], params["g3"], params["b3"]) + x
    return jnp.maximum(out, 0.0)


def init_params(key, in_planes, planes, share_planes):
    C = planes
    Cs = C // share_planes
    ks = jax.random.split(key, 24)

    def wmat(k, shape, fan_in):
        return (jax.random.normal(k, shape, dtype=jnp.float32)
                / jnp.sqrt(float(fan_in)))

    ones = lambda n: jnp.ones((1, n), jnp.float32)
    zeros = lambda n: jnp.zeros((1, n), jnp.float32)

    return dict(
        # linear1 (no bias) + bn1
        w1=wmat(ks[0], (in_planes, C), in_planes), g1=ones(C), b1=zeros(C),
        # q / k / v projections
        wq=wmat(ks[1], (C, C), C), bq=0.01 * wmat(ks[2], (1, C), 1),
        wk=wmat(ks[3], (C, C), C), bk=0.01 * wmat(ks[4], (1, C), 1),
        wv=wmat(ks[5], (C, C), C), bv=0.01 * wmat(ks[6], (1, C), 1),
        # linear_p: Linear(3,3) -> LN1d(3) -> ReLU -> Linear(3, C)
        wp1=wmat(ks[7], (3, 3), 3), bp1=0.01 * wmat(ks[8], (1, 3), 1),
        gp=ones(3), bp=zeros(3),
        wp2=wmat(ks[9], (3, C), 3), bp2=0.01 * wmat(ks[10], (1, C), 1),
        # linear_w: LN1d(C) -> ReLU -> Linear(C, Cs) -> LN1d(Cs) -> ReLU -> Linear(Cs, Cs)
        gw1=ones(C), bw1=zeros(C),
        ww1=wmat(ks[11], (C, Cs), C), bww1=0.01 * wmat(ks[12], (1, Cs), 1),
        gw2=ones(Cs), bw2=zeros(Cs),
        ww2=wmat(ks[13], (Cs, Cs), Cs), bww2=0.01 * wmat(ks[14], (1, Cs), 1),
        # bn2
        g2=ones(C), b2=zeros(C),
        # linear3 (no bias) + bn3
        w3=wmat(ks[15], (C, C), C), g3=ones(C), b3=zeros(C),
    )


if __name__ == "__main__":
    key = jax.random.PRNGKey(0)
    k_p, k_x, k_params = jax.random.split(key, 3)

    N = 64                 # total points (two batch segments of 32)
    in_planes = planes = 32
    share_planes, nsample = 8, 16

    p = jax.random.uniform(k_p, (N, 3), dtype=jnp.float32)          # coords
    x = jax.random.normal(k_x, (N, in_planes), dtype=jnp.float32)   # features
    o = jnp.array([32, 64], dtype=jnp.int32)                        # offsets

    params = init_params(k_params, in_planes, planes, share_planes)

    # block_n=32 -> 2 point tiles, exercising the multi-tile two-pass BN path.
    p_out, y, o_out = bottleneck_forward(p, x, o, params,
                                         share_planes=share_planes,
                                         nsample=nsample,
                                         block_n=32)
    jax.block_until_ready(y)
    assert y.shape == (N, planes)
    assert bool(jnp.all(jnp.isfinite(y)))

    with jax.default_matmul_precision("highest"):
        ref = bottleneck_reference(p, x, o, params,
                                   share_planes=share_planes,
                                   nsample=nsample)
    assert bool(jnp.allclose(y, ref, atol=2e-2, rtol=2e-2)), \
        float(jnp.max(jnp.abs(y - ref)))

    print("KERNEL_OK")
</pallas_src>

<mosaic_0001>
module attributes {stable_mosaic.version = 11 : i64} {
  func.func @qkv_kernel(%arg0: i32, %arg1: i32, %arg2: memref<32x32xf32, #tpu.memory_space<vmem>>, %arg3: memref<32x32xf32, #tpu.memory_space<vmem>>, %arg4: memref<1x32xf32, #tpu.memory_space<vmem>>, %arg5: memref<1x32xf32, #tpu.memory_space<vmem>>, %arg6: memref<32x96xf32, #tpu.memory_space<vmem>>, %arg7: memref<1x96xf32, #tpu.memory_space<vmem>>, %arg8: memref<32x96xf32, #tpu.memory_space<vmem>>, %arg9: memref<1x32xf32, #tpu.memory_space<vmem>>, %arg10: memref<1x32xf32, #tpu.memory_space<vmem>>) attributes {dimension_semantics = [#tpu.dimension_semantics<arbitrary>, #tpu.dimension_semantics<arbitrary>], iteration_bounds = array<i64: 2, 2>, scalar_prefetch = 0 : i64, scratch_operands = 2 : i64, tpu.core_type = #tpu.core_type<tc>, window_params = [{transform_indices = @transform_0, window_bounds = array<i64: 32, 32>}, {pipeline_mode = #tpu.pipeline_mode<synchronous>, transform_indices = @transform_1, window_bounds = array<i64: 32, 32>}, {pipeline_mode = #tpu.pipeline_mode<synchronous>, transform_indices = @transform_2, window_bounds = array<i64: 1, 32>}, {pipeline_mode = #tpu.pipeline_mode<synchronous>, transform_indices = @transform_3, window_bounds = array<i64: 1, 32>}, {pipeline_mode = #tpu.pipeline_mode<synchronous>, transform_indices = @transform_4, window_bounds = array<i64: 32, 96>}, {pipeline_mode = #tpu.pipeline_mode<synchronous>, transform_indices = @transform_5, window_bounds = array<i64: 1, 96>}, {transform_indices = @transform_6, window_bounds = array<i64: 32, 96>}]} {
    %c0 = arith.constant 0 : index
    %c0_0 = arith.constant 0 : index
    %0 = vector.load %arg2[%c0, %c0_0] : memref<32x32xf32, #tpu.memory_space<vmem>>, vector<32x32xf32>
    %c0_1 = arith.constant 0 : index
    %c0_2 = arith.constant 0 : index
    %1 = vector.load %arg3[%c0_1, %c0_2] : memref<32x32xf32, #tpu.memory_space<vmem>>, vector<32x32xf32>
    %cst = arith.constant dense<0.000000e+00> : vector<32x32xf32>
    %2 = tpu.matmul %0, %1, %cst {dimension_numbers = #tpu.dot_dimension_numbers<[1], [0], [0], [1], [0, 0, 1, 1], [], []>} : vector<32x32xf32>, vector<32x32xf32>, vector<32x32xf32> -> vector<32x32xf32>
    %c0_i32 = arith.constant 0 : i32
    %3 = arith.cmpi eq, %arg0, %c0_i32 : i32
    %4 = arith.extui %3 : i1 to i32
    %c0_i32_3 = arith.constant 0 : i32
    %5 = arith.cmpi ne, %4, %c0_i32_3 : i32
    scf.if %5 {
      %c0_i32_5 = arith.constant 0 : i32
      %9 = arith.cmpi eq, %arg1, %c0_i32_5 : i32
      %10 = arith.extui %9 : i1 to i32
      %c0_i32_6 = arith.constant 0 : i32
      %11 = arith.cmpi ne, %10, %c0_i32_6 : i32
      scf.if %11 {
        %cst_19 = arith.constant 0.000000e+00 : f32
        %26 = vector.broadcast %cst_19 : f32 to vector<1x32xf32>
        %c0_20 = arith.constant 0 : index
        %c0_21 = arith.constant 0 : index
        %27 = vector.load %arg9[%c0_20, %c0_21] : memref<1x32xf32, #tpu.memory_space<vmem>>, vector<1x32xf32>
        tpu.vector_store %arg9[%c0_20, %c0_21], %26 {strides = array<i32>} : memref<1x32xf32, #tpu.memory_space<vmem>>, vector<1x32xf32>,
        %cst_22 = arith.constant 0.000000e+00 : f32
        %28 = vector.broadcast %cst_22 : f32 to vector<1x32xf32>
        %c0_23 = arith.constant 0 : index
        %c0_24 = arith.constant 0 : index
        %29 = vector.load %arg10[%c0_23, %c0_24] : memref<1x32xf32, #tpu.memory_space<vmem>>, vector<1x32xf32>
        tpu.vector_store %arg10[%c0_23, %c0_24], %28 {strides = array<i32>} : memref<1x32xf32, #tpu.memory_space<vmem>>, vector<1x32xf32>,
      } else {
      }
      %c0_7 = arith.constant 0 : index
      %c0_8 = arith.constant 0 : index
      %12 = vector.load %arg9[%c0_7, %c0_8] : memref<1x32xf32, #tpu.memory_space<vmem>>, vector<1x32xf32>
      %cst_9 = arith.constant dense<0.000000e+00> : vector<32xf32>
      %13 = vector.multi_reduction <add>, %2, %cst_9 [0] : vector<32x32xf32> to vector<32xf32>
      %14 = vector.shape_cast %13 : vector<32xf32> to vector<1x32xf32>
      %15 = arith.addf %12, %14 : vector<1x32xf32>
      %c0_10 = arith.constant 0 : index
      %c0_11 = arith.constant 0 : index
      %16 = vector.load %arg9[%c0_10, %c0_11] : memref<1x32xf32, #tpu.memory_space<vmem>>, vector<1x32xf32>
      tpu.vector_store %arg9[%c0_10, %c0_11], %15 {strides = array<i32>} : memref<1x32xf32, #tpu.memory_space<vmem>>, vector<1x32xf32>,
      %c0_12 = arith.constant 0 : index
      %c0_13 = arith.constant 0 : index
      %17 = vector.load %arg10[%c0_12, %c0_13] : memref<1x32xf32, #tpu.memory_space<vmem>>, vector<1x32xf32>
      %18 = arith.mulf %2, %2 : vector<32x32xf32>
      %cst_14 = arith.constant dense<0.000000e+00> : vector<32xf32>
      %19 = vector.multi_reduction <add>, %18, %cst_14 [0] : vector<32x32xf32> to vector<32xf32>
      %20 = vector.shape_cast %19 : vector<32xf32> to vector<1x32xf32>
      %21 = arith.addf %17, %20 : vector<1x32xf32>
      %c0_15 = arith.constant 0 : index
      %c0_16 = arith.constant 0 : index
      %22 = vector.load %arg10[%c0_15, %c0_16] : memref<1x32xf32, #tpu.memory_space<vmem>>, vector<1x32xf32>
      tpu.vector_store %arg10[%c0_15, %c0_16], %21 {strides = array<i32>} : memref<1x32xf32, #tpu.memory_space<vmem>>, vector<1x32xf32>,
      %c1_i32_17 = arith.constant 1 : i32
      %23 = arith.cmpi eq, %arg1, %c1_i32_17 : i32
      %24 = arith.extui %23 : i1 to i32
      %c0_i32_18 = arith.constant 0 : i32
      %25 = arith.cmpi ne, %24, %c0_i32_18 : i32
      scf.if %25 {
        %c0_19 = arith.constant 0 : index
        %c0_20 = arith.constant 0 : index
        %26 = vector.load %arg9[%c0_19, %c0_20] : memref<1x32xf32, #tpu.memory_space<vmem>>, vector<1x32xf32>
        %cst_21 = arith.constant 6.400000e+01 : f32
        %27 = vector.broadcast %cst_21 : f32 to vector<1x32xf32>
        %28 = arith.divf %26, %27 : vector<1x32xf32>
        %c0_22 = arith.constant 0 : index
        %c0_23 = arith.constant 0 : index
        %29 = vector.load %arg10[%c0_22, %c0_23] : memref<1x32xf32, #tpu.memory_space<vmem>>, vector<1x32xf32>
        %cst_24 = arith.constant 6.400000e+01 : f32
        %30 = vector.broadcast %cst_24 : f32 to vector<1x32xf32>
        %31 = arith.divf %29, %30 : vector<1x32xf32>
        %32 = arith.mulf %28, %28 : vector<1x32xf32>
        %33 = arith.subf %31, %32 : vector<1x32xf32>
        %c0_25 = arith.constant 0 : index
        %c0_26 = arith.constant 0 : index
        %34 = vector.load %arg9[%c0_25, %c0_26] : memref<1x32xf32, #tpu.memory_space<vmem>>, vector<1x32xf32>
        tpu.vector_store %arg9[%c0_25, %c0_26], %28 {strides = array<i32>} : memref<1x32xf32, #tpu.memory_space<vmem>>, vector<1x32xf32>,
        %cst_27 = arith.constant 9.99999974E-6 : f32
        %35 = vector.broadcast %cst_27 : f32 to vector<1x32xf32>
        %36 = arith.addf %33, %35 : vector<1x32xf32>
        %37 = math.rsqrt %36 : vector<1x32xf32>
        %c0_28 = arith.constant 0 : index
        %c0_29 = arith.constant 0 : index
        %38 = vector.load %arg10[%c0_28, %c0_29] : memref<1x32xf32, #tpu.memory_space<vmem>>, vector<1x32xf32>
        tpu.vector_store %arg10[%c0_28, %c0_29], %37 {strides = array<i32>} : memref<1x32xf32, #tpu.memory_space<vmem>>, vector<1x32xf32>,
      } else {
      }
    } else {
    }
    %c1_i32 = arith.constant 1 : i32
    %6 = arith.cmpi eq, %arg0, %c1_i32 : i32
    %7 = arith.extui %6 : i1 to i32
    %c0_i32_4 = arith.constant 0 : i32
    %8 = arith.cmpi ne, %7, %c0_i32_4 : i32
    scf.if %8 {
      %c0_5 = arith.constant 0 : index
      %c0_6 = arith.constant 0 : index
      %9 = vector.load %arg9[%c0_5, %c0_6] : memref<1x32xf32, #tpu.memory_space<vmem>>, vector<1x32xf32>
      %c0_7 = arith.constant 0 : index
      %c0_8 = arith.constant 0 : index
      %10 = vector.load %arg10[%c0_7, %c0_8] : memref<1x32xf32, #tpu.memory_space<vmem>>, vector<1x32xf32>
      %c0_9 = arith.constant 0 : index
      %c0_10 = arith.constant 0 : index
      %11 = vector.load %arg4[%c0_9, %c0_10] : memref<1x32xf32, #tpu.memory_space<vmem>>, vector<1x32xf32>
      %c0_11 = arith.constant 0 : index
      %c0_12 = arith.constant 0 : index
      %12 = vector.load %arg5[%c0_11, %c0_12] : memref<1x32xf32, #tpu.memory_space<vmem>>, vector<1x32xf32>
      %13 = vector.broadcast %9 : vector<1x32xf32> to vector<32x32xf32>
      %14 = arith.subf %2, %13 : vector<32x32xf32>
      %15 = vector.broadcast %10 : vector<1x32xf32> to vector<32x32xf32>
      %16 = arith.mulf %14, %15 : vector<32x32xf32>
      %17 = vector.broadcast %11 : vector<1x32xf32> to vector<32x32xf32>
      %18 = arith.mulf %16, %17 : vector<32x32xf32>
      %19 = vector.broadcast %12 : vector<1x32xf32> to vector<32x32xf32>
      %20 = arith.addf %18, %19 : vector<32x32xf32>
      %cst_13 = arith.constant 0.000000e+00 : f32
      %21 = vector.broadcast %cst_13 : f32 to vector<32x32xf32>
      %22 = arith.maximumf %20, %21 : vector<32x32xf32>
      %c0_14 = arith.constant 0 : index
      %c0_15 = arith.constant 0 : index
      %23 = vector.load %arg6[%c0_14, %c0_15] : memref<32x96xf32, #tpu.memory_space<vmem>>, vector<32x96xf32>
      %cst_16 = arith.constant dense<0.000000e+00> : vector<32x96xf32>
      %24 = tpu.matmul %22, %23, %cst_16 {dimension_numbers = #tpu.dot_dimension_numbers<[1], [0], [0], [1], [0, 0, 1, 1], [], []>} : vector<32x32xf32>, vector<32x96xf32>, vector<32x96xf32> -> vector<32x96xf32>
      %c0_17 = arith.constant 0 : index
      %c0_18 = arith.constant 0 : index
      %25 = vector.load %arg7[%c0_17, %c0_18] : memref<1x96xf32, #tpu.memory_space<vmem>>, vector<1x96xf32>
      %26 = vector.broadcast %25 : vector<1x96xf32> to vector<32x96xf32>
      %27 = arith.addf %24, %26 : vector<32x96xf32>
      %c0_19 = arith.constant 0 : index
      %c0_20 = arith.constant 0 : index
      %28 = vector.load %arg8[%c0_19, %c0_20] : memref<32x96xf32, #tpu.memory_space<vmem>>, vector<32x96xf32>
      tpu.vector_store %arg8[%c0_19, %c0_20], %27 {strides = array<i32>} : memref<32x96xf32, #tpu.memory_space<vmem>>, vector<32x96xf32>,
    } else {
    }
    return
  }
  func.func @transform_0(%arg0: i32, %arg1: i32) -> (i32, i32) {
    %c0_i32 = arith.constant 0 : i32
    %c0_i32_0 = arith.constant 0 : i32
    return %arg1, %c0_i32 : i32, i32
  }
  func.func @transform_1(%arg0: i32, %arg1: i32) -> (i32, i32) {
    %c0_i32 = arith.constant 0 : i32
    %c0_i32_0 = arith.constant 0 : i32
    %c0_i32_1 = arith.constant 0 : i32
    return %c0_i32, %c0_i32_0 : i32, i32
  }
  func.func @transform_2(%arg0: i32, %arg1: i32) -> (i32, i32) {
    %c0_i32 = arith.constant 0 : i32
    %c0_i32_0 = arith.constant 0 : i32
    %c0_i32_1 = arith.constant 0 : i32
    return %c0_i32, %c0_i32_0 : i32, i32
  }
  func.func @transform_3(%arg0: i32, %arg1: i32) -> (i32, i32) {
    %c0_i32 = arith.constant 0 : i32
    %c0_i32_0 = arith.constant 0 : i32
    %c0_i32_1 = arith.constant 0 : i32
    return %c0_i32, %c0_i32_0 : i32, i32
  }
  func.func @transform_4(%arg0: i32, %arg1: i32) -> (i32, i32) {
    %c0_i32 = arith.constant 0 : i32
    %c0_i32_0 = arith.constant 0 : i32
    %c0_i32_1 = arith.constant 0 : i32
    return %c0_i32, %c0_i32_0 : i32, i32
  }
  func.func @transform_5(%arg0: i32, %arg1: i32) -> (i32, i32) {
    %c0_i32 = arith.constant 0 : i32
    %c0_i32_0 = arith.constant 0 : i32
    %c0_i32_1 = arith.constant 0 : i32
    return %c0_i32, %c0_i32_0 : i32, i32
  }
  func.func @transform_6(%arg0: i32, %arg1: i32) -> (i32, i32) {
    %c1_i32 = arith.constant 1 : i32
    %0 = arith.cmpi sge, %arg0, %c1_i32 : i32
    %c0_i32 = arith.constant 0 : i32
    %1 = arith.select %0, %arg1, %c0_i32 : i32
    %c0_i32_0 = arith.constant 0 : i32
    %c0_i32_1 = arith.constant 0 : i32
    return %1, %c0_i32_0 : i32, i32
  }
}

</mosaic_0001>

<llo_original>
// kernel: tpu_custom_call.1
$region0: #{tpu_custom_call.1}
  #allocation0 [shape = 'u32[]', space=smem, size = 0x4, offset = 0x4, fixed_abs, tag = 'smem constant byte address 0x4 - core index']
  #allocation1 [shape = 'u32[144,128]{1,0:T(1,128)}', space=vmem, size = 0x12000, scoped, tag = 'internal scratch']
  #allocation2 [shape = 'f32[1,32]{1,0:T(1,128)}', space=vmem, size = 0x200, scoped, tag = 'scratch operand']
  #allocation3 [shape = 'f32[1,32]{1,0:T(1,128)}', space=vmem, size = 0x200, scoped, tag = 'scratch operand']
  %s0 = inlined_call_operand.vmem [shape: f32[64,32], index: 0, kind: input, shape index: {}]
  %s1 = inlined_call_operand.vmem [shape: f32[32,32], index: 1, kind: input, shape index: {}]
  %s2 = inlined_call_operand.vmem [shape: f32[1,32], index: 2, kind: input, shape index: {}]
  %s3 = inlined_call_operand.vmem [shape: f32[1,32], index: 3, kind: input, shape index: {}]
  %s4 = inlined_call_operand.vmem [shape: f32[32,96], index: 4, kind: input, shape index: {}]
  %s5 = inlined_call_operand.vmem [shape: f32[1,96], index: 5, kind: input, shape index: {}]
  %s6 = inlined_call_operand.hbm [shape: f32[64,96], index: 6, kind: output, shape index: {}]
  %s7 = sld [smem:[#allocation0]]
  $region73: #{tpu_custom_call.1} parent=0
    _
  %s9 = ssub.s32 1, %s7
  %s10 = scalar_select 0, %s9, %s7
  $region1: #{tpu_custom_call.1} parent=0
    #allocation4 [shape = 'u8[32768]{0}', space=vmem, size = 0x8000, scoped, tag = 'output window, operand 0']
    #allocation5 [shape = 's32[2]{0}', space=sflag, size = 0x8, scoped, tag = 'scoped memory for tpu_custom_call.1']
    %11 = vsyncpa [#allocation5], 0
    %s12 = scalar_lea.sflag [#allocation5], 1
    %13 = vsyncpa %s12, 0
    loop: start=0, step=1, limit=6
    $region2: #{tpu_custom_call.1} parent=1 // loop_pre_header
      _
    $region3: #{tpu_custom_call.1} parent=1 // loop_header
      %s15 = sphi 0, %s19
      %p16 = scmp.ge.s32.totalorder %s15, 6
      %s22 = sphi 0, %s34
      %s23 = sphi 0, %s30
      %s24 = sphi 0, %s22
      %s25 = sphi 0, %s23
      %s26 = sphi 0, %s24
      %s27 = sphi 0, %s25
      %s37 = sphi 0, %s39
      %s40 = sphi 0, %s37
      %s41 = sphi 0, %s40
      %s57 = sphi 0, %s41
      %s61 = sphi 0, %s61
      %s63 = sphi 0, %s61
      %s64 = sphi 0, %s63
      %s78 = sphi 0, %s64
      %s82 = sphi 0, %s82
      %s84 = sphi 0, %s82
      %s85 = sphi 0, %s84
      %s99 = sphi 0, %s85
      %s103 = sphi 0, %s103
      %s105 = sphi 0, %s103
      %s106 = sphi 0, %s105
      %s120 = sphi 0, %s106
      %s124 = sphi 0, %s124
      %s126 = sphi 0, %s124
      %s127 = sphi 0, %s126
      %s141 = sphi 0, %s127
      %s145 = sphi 0, %s145
      %s147 = sphi 0, %s145
      %s148 = sphi 0, %s147
      %s162 = sphi 0, %s148
      %s172 = sphi 0, %s174
      %s175 = sphi 0, %s172
      %s176 = sphi 0, %s175
      %s192 = sphi 0, %s176
    $region4: #{tpu_custom_call.1} parent=1 // loop_header_branch
      %18 = sbr.rel (%p16) target = $region8
    $region5: #{tpu_custom_call.1} parent=1 // loop_body
      %s20 = ssub.s32 %s15, 1
      %s21 = ssub.s32 %s15, 2
      %s28 = sadd.s32 1, %s23
      %p29 = scmp.ge.s32.totalorder %s28, 2
      %s30 = scalar_select %p29, 0, %s28
      %s31 = sadd.s32 1, %s22
      %s32 = scalar_select %p29, %s31, %s22
      %p33 = scmp.ge.s32.totalorder %s32, 2
      %s34 = scalar_select %p33, 0, %s32
      %s35 = ssub.s32 %s23, %s30
      %p36 = scmp.eq.s32.totalorder %s35, 0
      %s38 = sadd.s32 %s37, 1
      %s39 = scalar_select %p36, %s37, %s38
      %p42 = pneg %p36
      %p43 = scmp.eq.s32.totalorder %s15, 3
      %p44 = por %p42, %p43
      %p45 = scmp.ne.s32.totalorder %s37, %s40
      %p46 = scmp.eq.s32.totalorder %s15, 0
      %p47 = por %p45, %p46
      %p48 = scmp.ne.s32.totalorder %s37, %s40
      %p49 = scmp.eq.s32.totalorder %s20, 3
      %p50 = por %p48, %p49
      %p51 = scmp.ne.s32.totalorder %s40, %s41
      %p52 = scmp.eq.s32.totalorder %s20, 0
      %p53 = por %p51, %p52
      %p54 = scmp.ne.s32.totalorder %s40, %s41
      %p55 = scmp.eq.s32.totalorder %s21, 3
      %p56 = por %p54, %p55
      %p58 = scmp.ne.s32.totalorder %s41, %s57
      %p59 = scmp.eq.s32.totalorder %s21, 0
      %p60 = por %p58, %p59
      %s62 = sadd.s32 %s61, 1
      %p65 = scmp.eq.s32.totalorder %s15, 3
      %p66 = scmp.ne.s32.totalorder %s61, %s63
      %p67 = scmp.eq.s32.totalorder %s15, 0
      %p68 = por %p66, %p67
      %p69 = scmp.ne.s32.totalorder %s61, %s63
      %p70 = scmp.eq.s32.totalorder %s20, 3
      %p71 = por %p69, %p70
      %p72 = scmp.ne.s32.totalorder %s63, %s64
      %p73 = scmp.eq.s32.totalorder %s20, 0
      %p74 = por %p72, %p73
      %p75 = scmp.ne.s32.totalorder %s63, %s64
      %p76 = scmp.eq.s32.totalorder %s21, 3
      %p77 = por %p75, %p76
      %p79 = scmp.ne.s32.totalorder %s64, %s78
      %p80 = scmp.eq.s32.totalorder %s21, 0
      %p81 = por %p79, %p80
      %s83 = sadd.s32 %s82, 1
      %p86 = scmp.eq.s32.totalorder %s15, 3
      %p87 = scmp.ne.s32.totalorder %s82, %s84
      %p88 = scmp.eq.s32.totalorder %s15, 0
      %p89 = por %p87, %p88
      %p90 = scmp.ne.s32.totalorder %s82, %s84
      %p91 = scmp.eq.s32.totalorder %s20, 3
      %p92 = por %p90, %p91
      %p93 = scmp.ne.s32.totalorder %s84, %s85
      %p94 = scmp.eq.s32.totalorder %s20, 0
      %p95 = por %p93, %p94
      %p96 = scmp.ne.s32.totalorder %s84, %s85
      %p97 = scmp.eq.s32.totalorder %s21, 3
      %p98 = por %p96, %p97
      %p100 = scmp.ne.s32.totalorder %s85, %s99
      %p101 = scmp.eq.s32.totalorder %s21, 0
      %p102 = por %p100, %p101
      %s104 = sadd.s32 %s103, 1
      %p107 = scmp.eq.s32.totalorder %s15, 3
      %p108 = scmp.ne.s32.totalorder %s103, %s105
      %p109 = scmp.eq.s32.totalorder %s15, 0
      %p110 = por %p108, %p109
      %p111 = scmp.ne.s32.totalorder %s103, %s105
      %p112 = scmp.eq.s32.totalorder %s20, 3
      %p113 = por %p111, %p112
      %p114 = scmp.ne.s32.totalorder %s105, %s106
      %p115 = scmp.eq.s32.totalorder %s20, 0
      %p116 = por %p114, %p115
      %p117 = scmp.ne.s32.totalorder %s105, %s106
      %p118 = scmp.eq.s32.totalorder %s21, 3
      %p119 = por %p117, %p118
      %p121 = scmp.ne.s32.totalorder %s106, %s120
      %p122 = scmp.eq.s32.totalorder %s21, 0
      %p123 = por %p121, %p122
      %s125 = sadd.s32 %s124, 1
      %p128 = scmp.eq.s32.totalorder %s15, 3
      %p129 = scmp.ne.s32.totalorder %s124, %s126
      %p130 = scmp.eq.s32.totalorder %s15, 0
      %p131 = por %p129, %p130
      %p132 = scmp.ne.s32.totalorder %s124, %s126
      %p133 = scmp.eq.s32.totalorder %s20, 3
      %p134 = por %p132, %p133
      %p135 = scmp.ne.s32.totalorder %s126, %s127
      %p136 = scmp.eq.s32.totalorder %s20, 0
      %p137 = por %p135, %p136
      %p138 = scmp.ne.s32.totalorder %s126, %s127
      %p139 = scmp.eq.s32.totalorder %s21, 3
      %p140 = por %p138, %p139
      %p142 = scmp.ne.s32.totalorder %s127, %s141
      %p143 = scmp.eq.s32.totalorder %s21, 0
      %p144 = por %p142, %p143
      %s146 = sadd.s32 %s145, 1
      %p149 = scmp.eq.s32.totalorder %s15, 3
      %p150 = scmp.ne.s32.totalorder %s145, %s147
      %p151 = scmp.eq.s32.totalorder %s15, 0
      %p152 = por %p150, %p151
      %p153 = scmp.ne.s32.totalorder %s145, %s147
      %p154 = scmp.eq.s32.totalorder %s20, 3
      %p155 = por %p153, %p154
      %p156 = scmp.ne.s32.totalorder %s147, %s148
      %p157 = scmp.eq.s32.totalorder %s20, 0
      %p158 = por %p156, %p157
      %p159 = scmp.ne.s32.totalorder %s147, %s148
      %p160 = scmp.eq.s32.totalorder %s21, 3
      %p161 = por %p159, %p160
      %p163 = scmp.ne.s32.totalorder %s148, %s162
      %p164 = scmp.eq.s32.totalorder %s21, 0
      %p165 = por %p163, %p164
      %p166 = scmp.ge.s32.totalorder %s22, 1
      %s167 = scalar_select %p166, %s23, 0
      %p168 = scmp.ge.s32.totalorder %s34, 1
      %s169 = scalar_select %p168, %s30, 0
      %s170 = ssub.s32 %s167, %s169
      %p171 = scmp.eq.s32.totalorder %s170, 0
      %s173 = sadd.s32 %s172, 1
      %s174 = scalar_select %p171, %s172, %s173
      %p177 = pneg %p171
      %p178 = scmp.eq.s32.totalorder %s15, 3
      %p179 = por %p177, %p178
      %p180 = scmp.ne.s32.totalorder %s172, %s175
      %p181 = scmp.eq.s32.totalorder %s15, 0
      %p182 = por %p180, %p181
      %p183 = scmp.ne.s32.totalorder %s172, %s175
      %p184 = scmp.eq.s32.totalorder %s20, 3
      %p185 = por %p183, %p184
      %p186 = scmp.ne.s32.totalorder %s175, %s176
      %p187 = scmp.eq.s32.totalorder %s20, 0
      %p188 = por %p186, %p187
      %p189 = scmp.ne.s32.totalorder %s175, %s176
      %p190 = scmp.eq.s32.totalorder %s21, 3
      %p191 = por %p189, %p190
      %p193 = scmp.ne.s32.totalorder %s176, %s192
      %p194 = scmp.eq.s32.totalorder %s21, 0
      %p195 = por %p193, %p194
      %p196 = scmp.le.s32.totalorder 1, %s15
      %p197 = scmp.lt.s32.totalorder %s15, 5
      %p198 = pnand %p196, %p197
      %p199 = pneg %p198
      // Predicated region
      $region9: #{tpu_custom_call.1} parent=5 // pred_check
        _
      $region10: #{tpu_custom_call.1} parent=5 // pred_check_branch
        %201 = sbr.rel (%p198) target = $region12
      $region11: #{tpu_custom_call.1} parent=5 // pred_region
        %s202 = ssub.s32 %s15, 1
        // Predicated region
        $region13: #{tpu_custom_call.1} parent=11 // pred_check
          %p203 = pneg %p74
        $region14: #{tpu_custom_call.1} parent=11 // pred_check_branch
          %205 = sbr.rel (%p203) target = $region16
        $region15: #{tpu_custom_call.1} parent=11 // pred_region
          _
        $region16: #{tpu_custom_call.1} parent=11 // pred_fallthru
          _
        // Predicated region
        $region17: #{tpu_custom_call.1} parent=11 // pred_check
          %p206 = pneg %p95
        $region18: #{tpu_custom_call.1} parent=11 // pred_check_branch
          %208 = sbr.rel (%p206) target = $region20
        $region19: #{tpu_custom_call.1} parent=11 // pred_region
          _
        $region20: #{tpu_custom_call.1} parent=11 // pred_fallthru
          _
        // Predicated region
        $region21: #{tpu_custom_call.1} parent=11 // pred_check
          %p209 = pneg %p116
        $region22: #{tpu_custom_call.1} parent=11 // pred_check_branch
          %211 = sbr.rel (%p209) target = $region24
        $region23: #{tpu_custom_call.1} parent=11 // pred_region
          _
        $region24: #{tpu_custom_call.1} parent=11 // pred_fallthru
          _
        // Predicated region
        $region25: #{tpu_custom_call.1} parent=11 // pred_check
          %p212 = pneg %p137
        $region26: #{tpu_custom_call.1} parent=11 // pred_check_branch
          %214 = sbr.rel (%p212) target = $region28
        $region27: #{tpu_custom_call.1} parent=11 // pred_region
          _
        $region28: #{tpu_custom_call.1} parent=11 // pred_fallthru
          _
        // Predicated region
        $region29: #{tpu_custom_call.1} parent=11 // pred_check
          %p215 = pneg %p158
        $region30: #{tpu_custom_call.1} parent=11 // pred_check_branch
          %217 = sbr.rel (%p215) target = $region32
        $region31: #{tpu_custom_call.1} parent=11 // pred_region
          _
        $region32: #{tpu_custom_call.1} parent=11 // pred_fallthru
          _
      $region12: #{tpu_custom_call.1} parent=5 // pred_fallthru
        _
      %p218 = scmp.lt.s32.totalorder %s15, 4
      // Predicated region
      $region33: #{tpu_custom_call.1} parent=5 // pred_check
        %p219 = pneg %p218
      $region34: #{tpu_custom_call.1} parent=5 // pred_check_branch
        %221 = sbr.rel (%p219) target = $region36
      $region35: #{tpu_custom_call.1} parent=5 // pred_region
        // Predicated region
        $region37: #{tpu_custom_call.1} parent=35 // pred_check
          %p222 = pneg %p47
        $region38: #{tpu_custom_call.1} parent=35 // pred_check_branch
          %224 = sbr.rel (%p222) target = $region40
        $region39: #{tpu_custom_call.1} parent=35 // pred_region
          %s225 = smul.u32 4, %s23
          %p226 = scmp.lt.s32.totalorder %s225, 7
          %s227 = scalar_select %p226, %s225, 7
          %s228 = smul.addr %s227, 8
          %s229 = scalar_lea.vmem %s0, %s228
          %s230 = smul.u32 4, %s23
        $region40: #{tpu_custom_call.1} parent=35 // pred_fallthru
          _
      $region36: #{tpu_custom_call.1} parent=5 // pred_fallthru
        _
      %p231 = scmp.le.s32.totalorder 1, %s15
      %p232 = scmp.lt.s32.totalorder %s15, 5
      %p233 = pnand %p231, %p232
      %p234 = pneg %p233
      // Predicated region
      $region41: #{tpu_custom_call.1} parent=5 // pred_check
        _
      $region42: #{tpu_custom_call.1} parent=5 // pred_check_branch
        %236 = sbr.rel (%p233) target = $region44
      $region43: #{tpu_custom_call.1} parent=5 // pred_region
        %s237 = ssub.s32 %s15, 1
        %s238 = smul.u32 4, %s25
        %p239 = scmp.lt.s32.totalorder %s238, 7
        %s240 = scalar_select %p239, %s238, 7
        %s241 = smul.addr %s240, 8
        %s242 = scalar_lea.vmem %s0, %s241
        %p243 = pneg %p53
        %p244 = pneg %p50
        %p245 = pneg %p74
        %p246 = pneg %p71
        %p247 = pneg %p95
        %p248 = pneg %p92
        %p249 = pneg %p116
        %p250 = pneg %p113
        %p251 = pneg %p137
        %p252 = pneg %p134
        %p253 = pneg %p158
        %p254 = pneg %p155
        %p255 = pneg %p188
        %p256 = pneg %p185
        %s257 = sand.u32 %s175, 1
        %s258 = scalar_lea.sflag [#allocation5], %s257
        %s259 = sand.u32 %s175, 1
        %s260 = smul.addr %s259, 32
        %s261 = scalar_lea.vmem [#allocation4], %s260
        %s262 = smul.u32 4, %s25
        %p263 = scmp.lt.s32.totalorder %s262, 7
        %s264 = scalar_select %p263, %s262, 7
        %s265 = smul.addr %s264, 8
        %s266 = scalar_lea.vmem %s0, %s265
        %s267 = smul.u32 4, %s25
        %p268 = scmp.ge.s32.totalorder %s24, 1
        %s269 = scalar_select %p268, %s25, 0
        %s270 = smul.u32 4, %s269
        %v271 = vld [vmem:[%s266] sm:$0xff]
        %v272 = vld [vmem:[%s266 + $0x8] sm:$0xff]
        %v273 = vld [vmem:[%s266 + $0x10] sm:$0xff]
        %v274 = vld [vmem:[%s266 + $0x18] sm:$0xff]
        %v275 = vld [vmem:[%s1] sm:$0xff]
        %v276 = vld [vmem:[%s1 + $0x8] sm:$0xff]
        %v277 = vld [vmem:[%s1 + $0x10] sm:$0xff]
        %v278 = vld [vmem:[%s1 + $0x18] sm:$0xff]
        %vm279 = vcmask 261120
        %v281 = vsel %vm279, %v271, 0
        %v284 = vsel %vm279, %v272, 0
        %v287 = vsel %vm279, %v273, 0
        %v290 = vsel %vm279, %v274, 0
        %292 = vmatprep.subr.mxu0 0.0
        %293 = vmatpush1.msra.mxu0 0.0
        %294 = vmatprep.subr.mxu0 0.0
        %295 = vmatpush1.msra.mxu0 0.0
        %296 = vmatprep.subr.mxu0 0.0
        %297 = vmatpush1.msra.mxu0 0.0
        %298 = vmatprep.subr.mxu0 0.0
        %299 = vmatpush1.msra.mxu0 0.0
        %300 = vmatprep.subr.mxu0 0.0
        %301 = vmatpush1.msra.mxu0 0.0
        %302 = vmatprep.subr.mxu0 0.0
        %303 = vmatpush1.msra.mxu0 0.0
        %304 = vmatprep.subr.mxu0 0.0
        %305 = vmatpush1.msra.mxu0 0.0
        %306 = vmatprep.subr.mxu0 0.0
        %307 = vmatpush1.msra.mxu0 0.0
        %308 = vmatprep.subr.mxu0 0.0
        %309 = vmatpush1.msra.mxu0 0.0
        %310 = vmatprep.subr.mxu0 0.0
        %311 = vmatpush1.msra.mxu0 0.0
        %312 = vmatprep.subr.mxu0 0.0
        %313 = vmatpush1.msra.mxu0 0.0
        %314 = vmatprep.subr.mxu0 0.0
        %315 = vmatpush1.msra.mxu0 0.0
        %316 = vmatprep.subr.mxu0 0.0
        %317 = vmatpush1.msra.mxu0 %v278
        %318 = vmatprep.subr.mxu0 0.0
        %319 = vmatpush1.msra.mxu0 %v277
        %320 = vmatprep.subr.mxu0 0.0
        %321 = vmatpush1.msra.mxu0 %v276
        %322 = vmatprep.subr.mxu0 0.0
        %323 = vmatpush1.msra.mxu0 %v275
        %324 = vmatprep.subr.mxu0 0.0
        %325 = vmatpush2.msra.mxu0 0.0
        %326 = vmatprep.subr.mxu0 0.0
        %327 = vmatpush2.msra.mxu0 0.0
        %328 = vmatprep.subr.mxu0 0.0
        %329 = vmatpush2.msra.mxu0 0.0
        %330 = vmatprep.subr.mxu0 0.0
        %331 = vmatpush2.msra.mxu0 0.0
        %332 = vmatprep.subr.mxu0 0.0
        %333 = vmatpush2.msra.mxu0 0.0
        %334 = vmatprep.subr.mxu0 0.0
        %335 = vmatpush2.msra.mxu0 0.0
        %336 = vmatprep.subr.mxu0 0.0
        %337 = vmatpush2.msra.mxu0 0.0
        %338 = vmatprep.subr.mxu0 0.0
        %339 = vmatpush2.msra.mxu0 0.0
        %340 = vmatprep.subr.mxu0 0.0
        %341 = vmatpush2.msra.mxu0 0.0
        %342 = vmatprep.subr.mxu0 0.0
        %343 = vmatpush2.msra.mxu0 0.0
        %344 = vmatprep.subr.mxu0 0.0
        %345 = vmatpush2.msra.mxu0 0.0
        %346 = vmatprep.subr.mxu0 0.0
        %347 = vmatpush2.msra.mxu0 0.0
        %348 = vmatprep.subr.mxu0 0.0
        %349 = vmatpush2.msra.mxu0 0.0
        %350 = vmatprep.subr.mxu0 0.0
        %351 = vmatpush2.msra.mxu0 0.0
        %352 = vmatprep.subr.mxu0 0.0
        %353 = vmatpush2.msra.mxu0 0.0
        %354 = vmatprep.subr.mxu0 0.0
        %355 = vmatpush2.msra.mxu0 0.0
        %356 = vmatprep.mubr.f32.mxu0 0.0
        %357 = vmatmul.mubr.f32.gmra.mxu0 %v281
        %v358 = vpop.f32.mrf.mxu0
        %v359 = vadd.f32 0.0, %v358
        %v360 = vpop.f32.mrf.mxu0
        %361 = vmatprep.mubr.f32.mxu0 0.0
        %362 = vmatmul.mubr.f32.gmra.mxu0 %v284
        %v363 = vpop.f32.mrf.mxu0
        %v364 = vadd.f32 0.0, %v363
        %v365 = vpop.f32.mrf.mxu0
        %366 = vmatprep.mubr.f32.mxu0 0.0
        %367 = vmatmul.mubr.f32.gmra.mxu0 %v287
        %v368 = vpop.f32.mrf.mxu0
        %v369 = vadd.f32 0.0, %v368
        %v370 = vpop.f32.mrf.mxu0
        %371 = vmatprep.mubr.f32.mxu0 0.0
        %372 = vmatmul.mubr.f32.gmra.mxu0 %v290
        %v373 = vpop.f32.mrf.mxu0
        %v374 = vadd.f32 0.0, %v373
        %v375 = vpop.f32.mrf.mxu0
        %376 = vdwg.mxu0
        %p377 = scmp.eq.s32.totalorder %s24, 0
        // Predicated region
        $region45: #{tpu_custom_call.1} parent=43 // pred_check
          %p378 = pneg %p377
        $region46: #{tpu_custom_call.1} parent=43 // pred_check_branch
          %380 = sbr.rel (%p378) target = $region48
        $region47: #{tpu_custom_call.1} parent=43 // pred_region
          %p381 = scmp.eq.s32.totalorder %s25, 0
          // Predicated region
          $region49: #{tpu_custom_call.1} parent=47 // pred_check
            %p382 = pneg %p381
          $region50: #{tpu_custom_call.1} parent=47 // pred_check_branch
            %384 = sbr.rel (%p382) target = $region52
          $region51: #{tpu_custom_call.1} parent=47 // pred_region
            %vm385 = vcmask 253952
            %386 = vst.msk [vmem:[#allocation2] sm:$0x1] %vm385, 0.0
            %387 = vst.msk [vmem:[#allocation3] sm:$0x1] %vm385, 0.0
          $region52: #{tpu_custom_call.1} parent=47 // pred_fallthru
            _
          %v388 = vld [vmem:[#allocation2] sm:$0x1]
          %v389 = vsel %vm279, %v359, 0.0
          %v390 = vsel %vm279, %v364, 0.0
          %v391 = vadd.f32 %v389, %v390
          %v392 = vsel %vm279, %v369, 0.0
          %v393 = vadd.f32 %v391, %v392
          %v394 = vsel %vm279, %v374, 0.0
          %v395 = vadd.f32 %v393, %v394
          %v396 = vrot.slane %v395, 4
          %v397 = vadd.f32 %v395, %v396
          %v398 = vrot.slane %v397, 2
          %v399 = vadd.f32 %v397, %v398
          %v400 = vrot.slane %v399, 1
          %v401 = vadd.f32 %v399, %v400
          %v402 = vadd.f32 %v388, %v401
          %vm403 = vcmask 253952
          %404 = vst.msk [vmem:[#allocation2] sm:$0x1] %vm403, %v402
          %v405 = vld [vmem:[#allocation3] sm:$0x1]
          %v406 = vmul.f32 %v359, %v359
          %v407 = vmul.f32 %v364, %v364
          %v408 = vmul.f32 %v369, %v369
          %v409 = vmul.f32 %v374, %v374
          %v410 = vsel %vm279, %v406, 0.0
          %v411 = vsel %vm279, %v407, 0.0
          %v412 = vadd.f32 %v410, %v411
          %v413 = vsel %vm279, %v408, 0.0
          %v414 = vadd.f32 %v412, %v413
          %v415 = vsel %vm279, %v409, 0.0
          %v416 = vadd.f32 %v414, %v415
          %v417 = vrot.slane %v416, 4
          %v418 = vadd.f32 %v416, %v417
          %v419 = vrot.slane %v418, 2
          %v420 = vadd.f32 %v418, %v419
          %v421 = vrot.slane %v420, 1
          %v422 = vadd.f32 %v420, %v421
          %v423 = vadd.f32 %v405, %v422
          %424 = vst.msk [vmem:[#allocation3] sm:$0x1] %vm403, %v423
          %p425 = scmp.eq.s32.totalorder %s25, 1
          // Predicated region
          $region53: #{tpu_custom_call.1} parent=47 // pred_check
            %p426 = pneg %p425
          $region54: #{tpu_custom_call.1} parent=47 // pred_check_branch
            %428 = sbr.rel (%p426) target = $region56
          $region55: #{tpu_custom_call.1} parent=47 // pred_region
            %v429 = vld [vmem:[#allocation2] sm:$0x1]
            %v430 = vrcp.pop 64.0
            %v431 = vmul.f32 %v429, %v430
            %v432 = vld [vmem:[#allocation3] sm:$0x1]
            %v433 = vmul.f32 %v432, %v430
            %v434 = vmul.f32 %v431, %v431
            %v435 = vsub.f32 %v433, %v434
            %436 = vst.msk [vmem:[#allocation2] sm:$0x1] %vm403, %v431
            %v437 = vadd.f32 %v435, 1e-05
            %v438 = vrsqrt.pop %v437
            %439 = vst.msk [vmem:[#allocation3] sm:$0x1] %vm403, %v438
          $region56: #{tpu_custom_call.1} parent=47 // pred_fallthru
            _
        $region48: #{tpu_custom_call.1} parent=43 // pred_fallthru
          _
        %p440 = scmp.eq.s32.totalorder %s24, 1
        // Predicated region
        $region57: #{tpu_custom_call.1} parent=43 // pred_check
          %p441 = pneg %p440
        $region58: #{tpu_custom_call.1} parent=43 // pred_check_branch
          %443 = sbr.rel (%p441) target = $region60
        $region59: #{tpu_custom_call.1} parent=43 // pred_region
          %v444 = vld [vmem:[#allocation2] sm:$0x1]
          %v445 = vld [vmem:[#allocation3] sm:$0x1]
          %v446 = vld [vmem:[%s2] sm:$0x1]
          %v447 = vld [vmem:[%s3] sm:$0x1]
          %v449 = vlaneseq
          %v450 = vshrl.u32 %v449, 7
          %v451 = vsub.s32 0, %v450
          %v452 = vrot.slane %v444, %v451
          %v454 = vsub.f32 %v359, %v452
          %v455 = vsub.f32 %v364, %v452
          %v456 = vsub.f32 %v369, %v452
          %v457 = vsub.f32 %v374, %v452
          %v459 = vlaneseq
          %v460 = vshrl.u32 %v459, 7
          %v461 = vsub.s32 0, %v460
          %v462 = vrot.slane %v445, %v461
          %v464 = vmul.f32 %v454, %v462
          %v465 = vmul.f32 %v455, %v462
          %v466 = vmul.f32 %v456, %v462
          %v467 = vmul.f32 %v457, %v462
          %v469 = vlaneseq
          %v470 = vshrl.u32 %v469, 7
          %v471 = vsub.s32 0, %v470
          %v472 = vrot.slane %v446, %v471
          %v474 = vmul.f32 %v464, %v472
          %v475 = vmul.f32 %v465, %v472
          %v476 = vmul.f32 %v466, %v472
          %v477 = vmul.f32 %v467, %v472
          %v479 = vlaneseq
          %v480 = vshrl.u32 %v479, 7
          %v481 = vsub.s32 0, %v480
          %v482 = vrot.slane %v447, %v481
          %v484 = vadd.f32 %v474, %v482
          %v485 = vadd.f32 %v475, %v482
          %v486 = vadd.f32 %v476, %v482
          %v487 = vadd.f32 %v477, %v482
          %v488 = vmax.f32 %v484, 0.0
          %v489 = vmax.f32 %v485, 0.0
          %v490 = vmax.f32 %v486, 0.0
          %v491 = vmax.f32 %v487, 0.0
          %v492 = vld [vmem:[%s4] sm:$0xff]
          %v493 = vld [vmem:[%s4 + $0x8] sm:$0xff]
          %v494 = vld [vmem:[%s4 + $0x10] sm:$0xff]
          %v495 = vld [vmem:[%s4 + $0x18] sm:$0xff]
          %v496 = vld [vmem:[%s5] sm:$0x1]
          %v498 = vlaneseq
          %v499 = vshrl.u32 %v498, 7
          %v500 = vsub.s32 0, %v499
          %v501 = vrot.slane %v496, %v500
          %v504 = vsel %vm279, %v488, 0
          %v507 = vsel %vm279, %v489, 0
          %v510 = vsel %vm279, %v490, 0
          %v513 = vsel %vm279, %v491, 0
          %515 = vmatprep.subr.mxu0 0.0
          %516 = vmatpush1.msra.mxu0 0.0
          %517 = vmatprep.subr.mxu0 0.0
          %518 = vmatpush1.msra.mxu0 0.0
          %519 = vmatprep.subr.mxu0 0.0
          %520 = vmatpush1.msra.mxu0 0.0
          %521 = vmatprep.subr.mxu0 0.0
          %522 = vmatpush1.msra.mxu0 0.0
          %523 = vmatprep.subr.mxu0 0.0
          %524 = vmatpush1.msra.mxu0 0.0
          %525 = vmatprep.subr.mxu0 0.0
          %526 = vmatpush1.msra.mxu0 0.0
          %527 = vmatprep.subr.mxu0 0.0
          %528 = vmatpush1.msra.mxu0 0.0
          %529 = vmatprep.subr.mxu0 0.0
          %530 = vmatpush1.msra.mxu0 0.0
          %531 = vmatprep.subr.mxu0 0.0
          %532 = vmatpush1.msra.mxu0 0.0
          %533 = vmatprep.subr.mxu0 0.0
          %534 = vmatpush1.msra.mxu0 0.0
          %535 = vmatprep.subr.mxu0 0.0
          %536 = vmatpush1.msra.mxu0 0.0
          %537 = vmatprep.subr.mxu0 0.0
          %538 = vmatpush1.msra.mxu0 0.0
          %539 = vmatprep.subr.mxu0 0.0
          %540 = vmatpush1.msra.mxu0 %v495
          %541 = vmatprep.subr.mxu0 0.0
          %542 = vmatpush1.msra.mxu0 %v494
          %543 = vmatprep.subr.mxu0 0.0
          %544 = vmatpush1.msra.mxu0 %v493
          %545 = vmatprep.subr.mxu0 0.0
          %546 = vmatpush1.msra.mxu0 %v492
          %547 = vmatprep.subr.mxu0 0.0
          %548 = vmatpush2.msra.mxu0 0.0
          %549 = vmatprep.subr.mxu0 0.0
          %550 = vmatpush2.msra.mxu0 0.0
          %551 = vmatprep.subr.mxu0 0.0
          %552 = vmatpush2.msra.mxu0 0.0
          %553 = vmatprep.subr.mxu0 0.0
          %554 = vmatpush2.msra.mxu0 0.0
          %555 = vmatprep.subr.mxu0 0.0
          %556 = vmatpush2.msra.mxu0 0.0
          %557 = vmatprep.subr.mxu0 0.0
          %558 = vmatpush2.msra.mxu0 0.0
          %559 = vmatprep.subr.mxu0 0.0
          %560 = vmatpush2.msra.mxu0 0.0
          %561 = vmatprep.subr.mxu0 0.0
          %562 = vmatpush2.msra.mxu0 0.0
          %563 = vmatprep.subr.mxu0 0.0
          %564 = vmatpush2.msra.mxu0 0.0
          %565 = vmatprep.subr.mxu0 0.0
          %566 = vmatpush2.msra.mxu0 0.0
          %567 = vmatprep.subr.mxu0 0.0
          %568 = vmatpush2.msra.mxu0 0.0
          %569 = vmatprep.subr.mxu0 0.0
          %570 = vmatpush2.msra.mxu0 0.0
          %571 = vmatprep.subr.mxu0 0.0
          %572 = vmatpush2.msra.mxu0 0.0
          %573 = vmatprep.subr.mxu0 0.0
          %574 = vmatpush2.msra.mxu0 0.0
          %575 = vmatprep.subr.mxu0 0.0
          %576 = vmatpush2.msra.mxu0 0.0
          %577 = vmatprep.subr.mxu0 0.0
          %578 = vmatpush2.msra.mxu0 0.0
          %579 = vmatprep.mubr.f32.mxu0 0.0
          %580 = vmatmul.mubr.f32.gmra.mxu0 %v504
          %v581 = vpop.f32.mrf.mxu0
          %v582 = vadd.f32 %v501, %v581
          %v583 = vpop.f32.mrf.mxu0
          %584 = vmatprep.mubr.f32.mxu0 0.0
          %585 = vmatmul.mubr.f32.gmra.mxu0 %v507
          %v586 = vpop.f32.mrf.mxu0
          %v587 = vadd.f32 %v501, %v586
          %v588 = vpop.f32.mrf.mxu0
          %589 = vmatprep.mubr.f32.mxu0 0.0
          %590 = vmatmul.mubr.f32.gmra.mxu0 %v510
          %v591 = vpop.f32.mrf.mxu0
          %v592 = vadd.f32 %v501, %v591
          %v593 = vpop.f32.mrf.mxu0
          %594 = vmatprep.mubr.f32.mxu0 0.0
          %595 = vmatmul.mubr.f32.gmra.mxu0 %v513
          %v596 = vpop.f32.mrf.mxu0
          %v597 = vadd.f32 %v501, %v596
          %v598 = vpop.f32.mrf.mxu0
          %599 = vdwg.mxu0
          %vm600 = vcmask 785408
          %601 = vst.msk [vmem:[%s261] sm:$0xff] %vm600, %v582
          %602 = vst.msk [vmem:[%s261 + $0x8] sm:$0xff] %vm600, %v587
          %603 = vst.msk [vmem:[%s261 + $0x10] sm:$0xff] %vm600, %v592
          %604 = vst.msk [vmem:[%s261 + $0x18] sm:$0xff] %vm600, %v597
        $region60: #{tpu_custom_call.1} parent=43 // pred_fallthru
          _
        %s605 = sand.u32 %s175, 1
        %s606 = scalar_lea.sflag [#allocation5], %s605
        %s607 = sand.u32 %s175, 1
        %s608 = smul.addr %s607, 32
        %s609 = scalar_lea.vmem [#allocation4], %s608
        // Predicated region
        $region61: #{tpu_custom_call.1} parent=43 // pred_check
          %p610 = pneg %p185
        $region62: #{tpu_custom_call.1} parent=43 // pred_check_branch
          %612 = sbr.rel (%p610) target = $region64
        $region63: #{tpu_custom_call.1} parent=43 // pred_region
          %p613 = scmp.ge.s32.totalorder %s24, 1
          %s614 = scalar_select %p613, %s25, 0
          %s615 = smul.u32 4, %s614
          %s617 = ssub.s32 512, 512
          %618 = vsyncadd %s606, %s617
          %s619 = smul.addr %s615, 128
          %s620 = scalar_lea.hbm %s6, %s619
          %s621 = sshll.u32 %s609, 4
          %s622 = int_to_ptr.vmem [resolvable:$true] %s621
          %627 = dma.vmem_to_hbm [thread:$0]  %s622, 512, %s620, %s606, 128, 128, 8
        $region64: #{tpu_custom_call.1} parent=43 // pred_fallthru
          _
      $region44: #{tpu_custom_call.1} parent=5 // pred_fallthru
        _
      %p628 = scmp.le.s32.totalorder 2, %s15
      // Predicated region
      $region65: #{tpu_custom_call.1} parent=5 // pred_check
        %p629 = pneg %p628
      $region66: #{tpu_custom_call.1} parent=5 // pred_check_branch
        %631 = sbr.rel (%p629) target = $region68
      $region67: #{tpu_custom_call.1} parent=5 // pred_region
        %s632 = ssub.s32 %s15, 2
        // Predicated region
        $region69: #{tpu_custom_call.1} parent=67 // pred_check
          %p633 = pneg %p191
        $region70: #{tpu_custom_call.1} parent=67 // pred_check_branch
          %635 = sbr.rel (%p633) target = $region72
        $region71: #{tpu_custom_call.1} parent=67 // pred_region
          %s636 = sand.u32 %s176, 1
          %s637 = scalar_lea.sflag [#allocation5], %s636
          %s638 = sand.u32 %s176, 1
          %s639 = smul.addr %s638, 32
          %s640 = scalar_lea.vmem [#allocation4], %s639
          %641 = dma.done %s637, 512
        $region72: #{tpu_custom_call.1} parent=67 // pred_fallthru
          _
      $region68: #{tpu_custom_call.1} parent=5 // pred_fallthru
        _
    $region6: #{tpu_custom_call.1} parent=1 // loop_footer
      %s19 = sadd.s32 1, %s15
    $region7: #{tpu_custom_call.1} parent=1 // loop_footer_branch
      %14 = sbr.rel target = $region3
    $region8: #{tpu_custom_call.1} parent=1 // loop_exit
      _
    %642 = vsyncpa [#allocation5], 1
    %s643 = scalar_lea.sflag [#allocation5], 1
    %644 = vsyncpa %s643, 1

</llo_original>
